<compile_context>
chip_gen: v6e
topology: v6e:2x2x1
jax: 0.10.0
libtpu: 0.0.40
codegen_flags: <defaults>
</compile_context>

<pallas_src>
import jax
import jax.numpy as jnp
from jax.experimental import pallas as pl
from jax.experimental.pallas import tpu as pltpu


def _round_up(a: int, m: int) -> int:
    return ((a + m - 1) // m) * m


def _ft_linear_kernel(x_ref, w1t_ref, b1_ref, w2t_ref, b2_ref, o_ref):
    """x_ref:   [TILE_B, C, HW]   (NCHW with spatial flattened)
       w1t_ref: [C, D]            (base-model weight, pre-transposed, pre-scaled by 1/HW)
       b1_ref:  [1, D]
       w2t_ref: [D, O_pad]        (fc weight, pre-transposed, lane-padded)
       b2_ref:  [1, O_pad]
       o_ref:   [TILE_B, O_pad]
    """
    # Global average pool: 1/HW is folded into w1t, so a cross-lane sum (XLU)
    # is enough here.
    pooled = jnp.sum(x_ref[...], axis=-1)                        # [TILE_B, C]
    feat = jnp.dot(pooled, w1t_ref[...],
                   preferred_element_type=jnp.float32) + b1_ref[...]
    feat = jnp.maximum(feat, 0.0)                                # ReLU
    out = jnp.dot(feat, w2t_ref[...],
                  preferred_element_type=jnp.float32) + b2_ref[...]
    o_ref[...] = out.astype(o_ref.dtype)                         # lane-dense store


def prepare_params(w1, b1, w2, b2, hw, o_pad):
    """One-time layout prep (call once, outside the per-call hot path)."""
    d = w1.shape[0]
    o = w2.shape[0]
    w1t = (w1 * (1.0 / float(hw))).T                  # [C, D], GAP scale folded in
    b1r = b1.reshape(1, d)
    w2t = jnp.pad(w2.T, ((0, 0), (0, o_pad - o)))     # [D, O_pad]
    b2r = jnp.pad(b2, (0, o_pad - o)).reshape(1, o_pad)
    return w1t, b1r, w2t, b2r


def ft_linear_classifier(x, w1t, b1r, w2t, b2r, out_features):
    """x: [B, C, H, W] float32 (NCHW); params from prepare_params."""
    B, C, H, W = x.shape
    HW = H * W
    D = w1t.shape[1]
    O_pad = w2t.shape[1]

    # ---- generation-aware VMEM budget ------------------------------------
    try:
        vmem_cap = int(pltpu.get_tpu_info().vmem_capacity_bytes)
    except Exception:
        vmem_cap = 64 * 1024 * 1024                   # v7x-safe fallback
    vmem_cap = max(vmem_cap, 32 * 1024 * 1024)
    usable = vmem_cap - max(8 * 1024 * 1024, vmem_cap // 8)   # ~56 MiB on v7x, ~112 MiB on v5e/v6e

    # (8,128)-tiled VMEM footprints.
    c_pad = _round_up(C, 8)
    hw_pad = _round_up(HW, 128)
    d_lane = _round_up(D, 128)
    x_row_bytes = c_pad * hw_pad * 4                  # per batch row of an x block
    out_row_bytes = O_pad * 4
    # single-buffered resident weights (pl.Buffered(1))
    weight_bytes = (c_pad * d_lane + 8 * d_lane
                    + _round_up(D, 8) * O_pad + 8 * O_pad) * 4
    headroom = 2 * 1024 * 1024

    avail = max(usable - weight_bytes - headroom, 0)
    # Size the batch tile assuming 2 x-buffers + 2 out-buffers; floor at 8 rows
    # (vmem_limit below reflects the *actual* footprint, so the floor never
    # silently understates VMEM use).
    tb_cap = (avail // (2 * x_row_bytes + 2 * out_row_bytes) // 8) * 8
    tb_cap = min(max(tb_cap, 8), 1024)

    if B <= 8:
        tile_b = B                                    # single step; block == batch dim
    else:
        # keep >= 2 grid steps so the "parallel" axis shards over both v7x cores
        tile_b = min(tb_cap, _round_up(pl.cdiv(B, 2), 8))
    grid = (pl.cdiv(B, tile_b),)

    x_block_bytes = max(tile_b, 8) * x_row_bytes
    out_block_bytes = max(tile_b, 8) * out_row_bytes

    def usage(n_xbuf):
        return n_xbuf * x_block_bytes + 2 * out_block_bytes + weight_bytes + headroom

    n_xbuf = 3 if usage(3) <= usable else 2           # deeper x buffering if it fits
    vmem_limit = int(min(max(usage(n_xbuf) + 4 * 1024 * 1024, 32 * 1024 * 1024),
                         vmem_cap))

    cost = pl.CostEstimate(
        flops=int(B * (C * HW + 2 * C * D + 2 * D * O_pad)),
        bytes_accessed=int(B * C * HW * 4
                           + (C * D + D + D * O_pad + O_pad) * 4
                           + B * O_pad * 4),
        transcendentals=0,
    )

    x3 = x.reshape(B, C, HW)                          # free reshape, no HBM copy

    def build(x_mode, w_mode):
        def spec(shape, idx, mode):
            if mode is None:
                return pl.BlockSpec(shape, idx)
            return pl.BlockSpec(shape, idx, pipeline_mode=mode)
        return pl.pallas_call(
            _ft_linear_kernel,
            out_shape=jax.ShapeDtypeStruct((B, O_pad), jnp.float32),
            grid=grid,
            in_specs=[
                # x: streamed, multi-buffered per batch tile
                spec((tile_b, C, HW), lambda i: (i, 0, 0), x_mode),
                # weights & biases: constant index_map -> VMEM-resident, single-buffered
                spec((C, D), lambda i: (0, 0), w_mode),
                spec((1, D), lambda i: (0, 0), w_mode),
                spec((D, O_pad), lambda i: (0, 0), w_mode),
                spec((1, O_pad), lambda i: (0, 0), w_mode),
            ],
            out_specs=pl.BlockSpec((tile_b, O_pad), lambda i: (i, 0)),
            compiler_params=pltpu.CompilerParams(
                dimension_semantics=("parallel",),
                vmem_limit_bytes=vmem_limit,
            ),
            cost_estimate=cost,
        )

    try:
        out_padded = build(pl.Buffered(n_xbuf), pl.Buffered(1))(x3, w1t, b1r, w2t, b2r)
    except Exception:
        # TODO(synk): pipeline_mode buffering hints unsupported on this JAX
        # version; fall back to default double-buffering (identical results).
        out_padded = build(None, None)(x3, w1t, b1r, w2t, b2r)

    return out_padded[:, :out_features]


def _reference(x, w1, b1, w2, b2):
    pooled = jnp.mean(x, axis=(2, 3))
    feat = jnp.maximum(pooled @ w1.T + b1, 0.0)
    return feat @ w2.T + b2


if __name__ == "__main__":
    # Small shapes consistent with the module's forward.
    B, C, H, W = 2, 4, 16, 16
    DIM = 32          # base_model.dimension
    OUT = 10          # output_size

    key = jax.random.PRNGKey(0)
    kx, k1, k2, k3, k4 = jax.random.split(key, 5)

    x = jax.random.normal(kx, (B, C, H, W), dtype=jnp.float32)
    # Deterministic, nn.Linear-like init.
    w1 = jax.random.normal(k1, (DIM, C), dtype=jnp.float32) * (1.0 / jnp.sqrt(C))
    b1 = jax.random.normal(k2, (DIM,), dtype=jnp.float32) * 0.01
    w2 = jax.random.normal(k3, (OUT, DIM), dtype=jnp.float32) * (1.0 / jnp.sqrt(DIM))
    b2 = jax.random.normal(k4, (OUT,), dtype=jnp.float32) * 0.01

    O_pad = _round_up(max(OUT, 128), 128)
    # One-time layout prep (pre-transpose, lane-pad, fold 1/HW into W1^T).
    w1t, b1r, w2t, b2r = prepare_params(w1, b1, w2, b2, H * W, O_pad)

    out = ft_linear_classifier(x, w1t, b1r, w2t, b2r, OUT)
    out = jax.block_until_ready(out)

    ref = _reference(x, w1, b1, w2, b2)
    assert out.shape == (B, OUT), out.shape
    assert jnp.allclose(out, ref, atol=1e-3, rtol=1e-3), \
        f"max err {jnp.max(jnp.abs(out - ref))}"

    print("KERNEL_OK")
</pallas_src>

<mosaic_0001>
module attributes {stable_mosaic.version = 11 : i64} {
  func.func @_ft_linear_kernel(%arg0: i32, %arg1: memref<2x4x256xf32, #tpu.memory_space<vmem>>, %arg2: memref<4x32xf32, #tpu.memory_space<vmem>>, %arg3: memref<1x32xf32, #tpu.memory_space<vmem>>, %arg4: memref<32x128xf32, #tpu.memory_space<vmem>>, %arg5: memref<1x128xf32, #tpu.memory_space<vmem>>, %arg6: memref<2x128xf32, #tpu.memory_space<vmem>>) attributes {dimension_semantics = [#tpu.dimension_semantics<parallel>], iteration_bounds = array<i64: 1>, scalar_prefetch = 0 : i64, scratch_operands = 0 : i64, tpu.core_type = #tpu.core_type<tc>, window_params = [{transform_indices = @transform_0, window_bounds = array<i64: 2, 4, 256>}, {pipeline_mode = #tpu.pipeline_mode<synchronous>, transform_indices = @transform_1, window_bounds = array<i64: 4, 32>}, {pipeline_mode = #tpu.pipeline_mode<synchronous>, transform_indices = @transform_2, window_bounds = array<i64: 1, 32>}, {pipeline_mode = #tpu.pipeline_mode<synchronous>, transform_indices = @transform_3, window_bounds = array<i64: 32, 128>}, {pipeline_mode = #tpu.pipeline_mode<synchronous>, transform_indices = @transform_4, window_bounds = array<i64: 1, 128>}, {transform_indices = @transform_5, window_bounds = array<i64: 2, 128>}]} {
    %c0 = arith.constant 0 : index
    %c0_0 = arith.constant 0 : index
    %c0_1 = arith.constant 0 : index
    %0 = vector.load %arg1[%c0, %c0_0, %c0_1] : memref<2x4x256xf32, #tpu.memory_space<vmem>>, vector<2x4x256xf32>
    %cst = arith.constant dense<0.000000e+00> : vector<2x4xf32>
    %1 = vector.multi_reduction <add>, %0, %cst [2] : vector<2x4x256xf32> to vector<2x4xf32>
    %c0_2 = arith.constant 0 : index
    %c0_3 = arith.constant 0 : index
    %2 = vector.load %arg2[%c0_2, %c0_3] : memref<4x32xf32, #tpu.memory_space<vmem>>, vector<4x32xf32>
    %cst_4 = arith.constant dense<0.000000e+00> : vector<2x32xf32>
    %3 = tpu.matmul %1, %2, %cst_4 {dimension_numbers = #tpu.dot_dimension_numbers<[1], [0], [0], [1], [0, 0, 1, 1], [], []>} : vector<2x4xf32>, vector<4x32xf32>, vector<2x32xf32> -> vector<2x32xf32>
    %c0_5 = arith.constant 0 : index
    %c0_6 = arith.constant 0 : index
    %4 = vector.load %arg3[%c0_5, %c0_6] : memref<1x32xf32, #tpu.memory_space<vmem>>, vector<1x32xf32>
    %5 = vector.broadcast %4 : vector<1x32xf32> to vector<2x32xf32>
    %6 = arith.addf %3, %5 : vector<2x32xf32>
    %cst_7 = arith.constant 0.000000e+00 : f32
    %7 = vector.broadcast %cst_7 : f32 to vector<2x32xf32>
    %8 = arith.maximumf %6, %7 : vector<2x32xf32>
    %c0_8 = arith.constant 0 : index
    %c0_9 = arith.constant 0 : index
    %9 = vector.load %arg4[%c0_8, %c0_9] : memref<32x128xf32, #tpu.memory_space<vmem>>, vector<32x128xf32>
    %cst_10 = arith.constant dense<0.000000e+00> : vector<2x128xf32>
    %10 = tpu.matmul %8, %9, %cst_10 {dimension_numbers = #tpu.dot_dimension_numbers<[1], [0], [0], [1], [0, 0, 1, 1], [], []>} : vector<2x32xf32>, vector<32x128xf32>, vector<2x128xf32> -> vector<2x128xf32>
    %c0_11 = arith.constant 0 : index
    %c0_12 = arith.constant 0 : index
    %11 = vector.load %arg5[%c0_11, %c0_12] : memref<1x128xf32, #tpu.memory_space<vmem>>, vector<1x128xf32>
    %12 = vector.broadcast %11 : vector<1x128xf32> to vector<2x128xf32>
    %13 = arith.addf %10, %12 : vector<2x128xf32>
    %c0_13 = arith.constant 0 : index
    %c0_14 = arith.constant 0 : index
    %14 = vector.load %arg6[%c0_13, %c0_14] : memref<2x128xf32, #tpu.memory_space<vmem>>, vector<2x128xf32>
    tpu.vector_store %arg6[%c0_13, %c0_14], %13 {strides = array<i32>} : memref<2x128xf32, #tpu.memory_space<vmem>>, vector<2x128xf32>,
    return
  }
  func.func @transform_0(%arg0: i32) -> (i32, i32, i32) {
    %c0_i32 = arith.constant 0 : i32
    %c0_i32_0 = arith.constant 0 : i32
    %c0_i32_1 = arith.constant 0 : i32
    return %arg0, %c0_i32, %c0_i32_0 : i32, i32, i32
  }
  func.func @transform_1(%arg0: i32) -> (i32, i32) {
    %c0_i32 = arith.constant 0 : i32
    %c0_i32_0 = arith.constant 0 : i32
    %c0_i32_1 = arith.constant 0 : i32
    return %c0_i32, %c0_i32_0 : i32, i32
  }
  func.func @transform_2(%arg0: i32) -> (i32, i32) {
    %c0_i32 = arith.constant 0 : i32
    %c0_i32_0 = arith.constant 0 : i32
    %c0_i32_1 = arith.constant 0 : i32
    return %c0_i32, %c0_i32_0 : i32, i32
  }
  func.func @transform_3(%arg0: i32) -> (i32, i32) {
    %c0_i32 = arith.constant 0 : i32
    %c0_i32_0 = arith.constant 0 : i32
    %c0_i32_1 = arith.constant 0 : i32
    return %c0_i32, %c0_i32_0 : i32, i32
  }
  func.func @transform_4(%arg0: i32) -> (i32, i32) {
    %c0_i32 = arith.constant 0 : i32
    %c0_i32_0 = arith.constant 0 : i32
    %c0_i32_1 = arith.constant 0 : i32
    return %c0_i32, %c0_i32_0 : i32, i32
  }
  func.func @transform_5(%arg0: i32) -> (i32, i32) {
    %c0_i32 = arith.constant 0 : i32
    %c0_i32_0 = arith.constant 0 : i32
    return %arg0, %c0_i32 : i32, i32
  }
}

</mosaic_0001>

<llo_original>
// kernel: tpu_custom_call.1
$region0: #{tpu_custom_call.1}
  #allocation0 [shape = 'u32[]', space=smem, size = 0x4, offset = 0x4, fixed_abs, tag = 'smem constant byte address 0x4 - core index']
  #allocation1 [shape = 'u32[144,128]{1,0:T(1,128)}', space=vmem, size = 0x12000, scoped, tag = 'internal scratch']
  %s0 = inlined_call_operand.hbm [shape: f32[2,4,256], index: 0, kind: input, shape index: {}]
  %s1 = inlined_call_operand.hbm [shape: f32[4,32], index: 1, kind: input, shape index: {}]
  %s2 = inlined_call_operand.vmem [shape: f32[1,32], index: 2, kind: input, shape index: {}]
  %s3 = inlined_call_operand.hbm [shape: f32[32,128], index: 3, kind: input, shape index: {}]
  %s4 = inlined_call_operand.vmem [shape: f32[1,128], index: 4, kind: input, shape index: {}]
  %s5 = inlined_call_operand.hbm [shape: f32[2,128], index: 5, kind: output, shape index: {}]
  %s6 = sld [smem:[#allocation0]]
  $region42: #{tpu_custom_call.1} parent=0
    _
  %s8 = ssub.s32 1, %s6
  %s9 = scalar_select 0, %s8, %s6
  $region1: #{tpu_custom_call.1} parent=0
    #allocation2 [shape = 'u8[8192]{0}', space=vmem, size = 0x2000, scoped, tag = 'input window, operand 0, single buffered']
    #allocation3 [shape = 's32[1]{0}', space=sflag, size = 0x4, scoped, tag = 'scoped memory for tpu_custom_call.1']
    #allocation4 [shape = 's32[1]{0}', space=sflag, size = 0x4, scoped, tag = 'scoped memory for tpu_custom_call.1']
    #allocation5 [shape = 'u8[2048]{0}', space=vmem, size = 0x800, scoped, tag = 'input window, operand 1, single buffered']
    #allocation6 [shape = 's32[1]{0}', space=sflag, size = 0x4, scoped, tag = 'scoped memory for tpu_custom_call.1']
    #allocation7 [shape = 'u8[16384]{0}', space=vmem, size = 0x4000, scoped, tag = 'input window, operand 3, single buffered']
    #allocation8 [shape = 'u8[1024]{0}', space=vmem, size = 0x400, scoped, tag = 'output window, operand 0, single buffered']
    %10 = vsyncpa [#allocation3], 0
    %11 = vsyncpa [#allocation6], 0
    %12 = vsyncpa [#allocation4], 0
    // Predicated region
    $region2: #{tpu_custom_call.1} parent=1 // pred_check
      _
    $region3: #{tpu_custom_call.1} parent=1 // pred_check_branch
      %14 = sbr.rel (0) target = $region5
    $region4: #{tpu_custom_call.1} parent=1 // pred_region
      %s16 = ssub.s32 256, 256
      %17 = vsyncadd [#allocation3], %s16
      %s18 = sshll.u32 [#allocation2], 4
      %s19 = int_to_ptr.vmem [resolvable:$true] %s18
      %24 = dma.hbm_to_vmem [thread:$0]  %s0, 256, %s19, [#allocation3], 128, 128, 8
    $region5: #{tpu_custom_call.1} parent=1 // pred_fallthru
      _
    // Predicated region
    $region6: #{tpu_custom_call.1} parent=1 // pred_check
      _
    $region7: #{tpu_custom_call.1} parent=1 // pred_check_branch
      %26 = sbr.rel (0) target = $region9
    $region8: #{tpu_custom_call.1} parent=1 // pred_region
      %s28 = ssub.s32 64, 64
      %29 = vsyncadd [#allocation6], %s28
      %s31 = sshll.u32 [#allocation5], 4
      %s32 = int_to_ptr.vmem [resolvable:$true] %s31
      %34 = dma.hbm_to_vmem [thread:$0]  %s1, 64, %s32, [#allocation6]
    $region9: #{tpu_custom_call.1} parent=1 // pred_fallthru
      _
    // Predicated region
    $region10: #{tpu_custom_call.1} parent=1 // pred_check
      _
    $region11: #{tpu_custom_call.1} parent=1 // pred_check_branch
      %36 = sbr.rel (0) target = $region13
    $region12: #{tpu_custom_call.1} parent=1 // pred_region
      _
    $region13: #{tpu_custom_call.1} parent=1 // pred_fallthru
      _
    // Predicated region
    $region14: #{tpu_custom_call.1} parent=1 // pred_check
      _
    $region15: #{tpu_custom_call.1} parent=1 // pred_check_branch
      %38 = sbr.rel (0) target = $region17
    $region16: #{tpu_custom_call.1} parent=1 // pred_region
      %s40 = ssub.s32 512, 512
      %41 = vsyncadd [#allocation6], %s40
      %s42 = sshll.u32 [#allocation7], 4
      %s43 = int_to_ptr.vmem [resolvable:$true] %s42
      %48 = dma.hbm_to_vmem [thread:$0]  %s3, 512, %s43, [#allocation6], 128, 128, 8
    $region17: #{tpu_custom_call.1} parent=1 // pred_fallthru
      _
    // Predicated region
    $region18: #{tpu_custom_call.1} parent=1 // pred_check
      _
    $region19: #{tpu_custom_call.1} parent=1 // pred_check_branch
      %50 = sbr.rel (0) target = $region21
    $region20: #{tpu_custom_call.1} parent=1 // pred_region
      _
    $region21: #{tpu_custom_call.1} parent=1 // pred_fallthru
      _
    // Predicated region
    $region22: #{tpu_custom_call.1} parent=1 // pred_check
      _
    $region23: #{tpu_custom_call.1} parent=1 // pred_check_branch
      %52 = sbr.rel (0) target = $region25
    $region24: #{tpu_custom_call.1} parent=1 // pred_region
      %53 = dma.done [#allocation3], 256
    $region25: #{tpu_custom_call.1} parent=1 // pred_fallthru
      _
    // Predicated region
    $region26: #{tpu_custom_call.1} parent=1 // pred_check
      _
    $region27: #{tpu_custom_call.1} parent=1 // pred_check_branch
      %55 = sbr.rel (0) target = $region29
    $region28: #{tpu_custom_call.1} parent=1 // pred_region
      %56 = dma.done [#allocation6], 64
    $region29: #{tpu_custom_call.1} parent=1 // pred_fallthru
      _
    // Predicated region
    $region30: #{tpu_custom_call.1} parent=1 // pred_check
      _
    $region31: #{tpu_custom_call.1} parent=1 // pred_check_branch
      %58 = sbr.rel (0) target = $region33
    $region32: #{tpu_custom_call.1} parent=1 // pred_region
      %59 = dma.done [#allocation6], 512
    $region33: #{tpu_custom_call.1} parent=1 // pred_fallthru
      _
    %v60 = vld [vmem:[#allocation2] sm:$0xff]
    %v61 = vld [vmem:[#allocation2 + $0x8] sm:$0xff]
    %v64 = vcombine.high %v60, %v60
    %v65 = vcombine.high %v61, %v61
    %vm68 = vcmask 1043456
    %v69 = vsel %vm68, %v60, 0.0
    %v70 = vsel %vm68, %v64, 0.0
    %v71 = vadd.f32 %v69, %v70
    %72 = vadd.xlane.f32.xlu0 %v71
    %v73 = vpop.xlane.xlu0 %72
    %v74 = vsel %vm68, %v61, 0.0
    %v75 = vsel %vm68, %v65, 0.0
    %v76 = vadd.f32 %v74, %v75
    %77 = vadd.xlane.f32.xlu0 %v76
    %v78 = vpop.xlane.xlu0 %77
    %v79 = vld [vmem:[#allocation5] sm:$0xf]
    %v80 = vld [vmem:[%s2] sm:$0x1]
    %v82 = vlaneseq
    %v83 = vshrl.u32 %v82, 7
    %v84 = vsub.s32 0, %v83
    %v85 = vrot.slane %v80, %v84
    %v89 = vlaneseq
    %v90 = vand.u32 %v89, 127
    %v91 = vlaneseq
    %v92 = vshrl.u32 %v91, 7
    %v93 = vsub.s32 %v90, %v92
    %v94 = vrot.slane %v73, %v93
    %v95 = vlaneseq
    %v96 = vshrl.u32 %v95, 7
    %v97 = vsub.s32 %v90, %v96
    %v98 = vrot.slane %v78, %v97
    %vm99 = vcmask 1041409
    %v100 = vsel %vm99, %v98, %v94
    %vm101 = vcmask 31744
    %v102 = vsel %vm101, %v100, 0
    %v105 = vsel %vm68, %v79, 0
    %107 = vmatprep.subr.mxu0 0.0
    %108 = vmatpush1.msra.mxu0 0.0
    %109 = vmatprep.subr.mxu0 0.0
    %110 = vmatpush1.msra.mxu0 0.0
    %111 = vmatprep.subr.mxu0 0.0
    %112 = vmatpush1.msra.mxu0 0.0
    %113 = vmatprep.subr.mxu0 0.0
    %114 = vmatpush1.msra.mxu0 0.0
    %115 = vmatprep.subr.mxu0 0.0
    %116 = vmatpush1.msra.mxu0 0.0
    %117 = vmatprep.subr.mxu0 0.0
    %118 = vmatpush1.msra.mxu0 0.0
    %119 = vmatprep.subr.mxu0 0.0
    %120 = vmatpush1.msra.mxu0 0.0
    %121 = vmatprep.subr.mxu0 0.0
    %122 = vmatpush1.msra.mxu0 0.0
    %123 = vmatprep.subr.mxu0 0.0
    %124 = vmatpush1.msra.mxu0 0.0
    %125 = vmatprep.subr.mxu0 0.0
    %126 = vmatpush1.msra.mxu0 0.0
    %127 = vmatprep.subr.mxu0 0.0
    %128 = vmatpush1.msra.mxu0 0.0
    %129 = vmatprep.subr.mxu0 0.0
    %130 = vmatpush1.msra.mxu0 0.0
    %131 = vmatprep.subr.mxu0 0.0
    %132 = vmatpush1.msra.mxu0 0.0
    %133 = vmatprep.subr.mxu0 0.0
    %134 = vmatpush1.msra.mxu0 0.0
    %135 = vmatprep.subr.mxu0 0.0
    %136 = vmatpush1.msra.mxu0 0.0
    %137 = vmatprep.subr.mxu0 0.0
    %138 = vmatpush1.msra.mxu0 %v105
    %139 = vmatprep.subr.mxu0 0.0
    %140 = vmatpush2.msra.mxu0 0.0
    %141 = vmatprep.subr.mxu0 0.0
    %142 = vmatpush2.msra.mxu0 0.0
    %143 = vmatprep.subr.mxu0 0.0
    %144 = vmatpush2.msra.mxu0 0.0
    %145 = vmatprep.subr.mxu0 0.0
    %146 = vmatpush2.msra.mxu0 0.0
    %147 = vmatprep.subr.mxu0 0.0
    %148 = vmatpush2.msra.mxu0 0.0
    %149 = vmatprep.subr.mxu0 0.0
    %150 = vmatpush2.msra.mxu0 0.0
    %151 = vmatprep.subr.mxu0 0.0
    %152 = vmatpush2.msra.mxu0 0.0
    %153 = vmatprep.subr.mxu0 0.0
    %154 = vmatpush2.msra.mxu0 0.0
    %155 = vmatprep.subr.mxu0 0.0
    %156 = vmatpush2.msra.mxu0 0.0
    %157 = vmatprep.subr.mxu0 0.0
    %158 = vmatpush2.msra.mxu0 0.0
    %159 = vmatprep.subr.mxu0 0.0
    %160 = vmatpush2.msra.mxu0 0.0
    %161 = vmatprep.subr.mxu0 0.0
    %162 = vmatpush2.msra.mxu0 0.0
    %163 = vmatprep.subr.mxu0 0.0
    %164 = vmatpush2.msra.mxu0 0.0
    %165 = vmatprep.subr.mxu0 0.0
    %166 = vmatpush2.msra.mxu0 0.0
    %167 = vmatprep.subr.mxu0 0.0
    %168 = vmatpush2.msra.mxu0 0.0
    %169 = vmatprep.subr.mxu0 0.0
    %170 = vmatpush2.msra.mxu0 0.0
    %171 = vmatprep.mubr.f32.mxu0 0.0
    %172 = vmatmul.mubr.f32.gmra.mxu0 %v102
    %v173 = vpop.f32.mrf.mxu0
    %v174 = vadd.f32 %v85, %v173
    %v175 = vpop.f32.mrf.mxu0
    %176 = vdwg.mxu0
    %v177 = vmax.f32 %v174, 0.0
    %v178 = vld [vmem:[#allocation7] sm:$0xff]
    %v179 = vld [vmem:[#allocation7 + $0x8] sm:$0xff]
    %v180 = vld [vmem:[#allocation7 + $0x10] sm:$0xff]
    %v181 = vld [vmem:[#allocation7 + $0x18] sm:$0xff]
    %v182 = vld [vmem:[%s4] sm:$0x1]
    %v184 = vlaneseq
    %v185 = vshrl.u32 %v184, 7
    %v186 = vsub.s32 0, %v185
    %v187 = vrot.slane %v182, %v186
    %vm189 = vcmask 261120
    %v191 = vsel %vm189, %v177, 0
    %193 = vmatprep.subr.mxu0 0.0
    %194 = vmatpush1.msra.mxu0 0.0
    %195 = vmatprep.subr.mxu0 0.0
    %196 = vmatpush1.msra.mxu0 0.0
    %197 = vmatprep.subr.mxu0 0.0
    %198 = vmatpush1.msra.mxu0 0.0
    %199 = vmatprep.subr.mxu0 0.0
    %200 = vmatpush1.msra.mxu0 0.0
    %201 = vmatprep.subr.mxu0 0.0
    %202 = vmatpush1.msra.mxu0 0.0
    %203 = vmatprep.subr.mxu0 0.0
    %204 = vmatpush1.msra.mxu0 0.0
    %205 = vmatprep.subr.mxu0 0.0
    %206 = vmatpush1.msra.mxu0 0.0
    %207 = vmatprep.subr.mxu0 0.0
    %208 = vmatpush1.msra.mxu0 0.0
    %209 = vmatprep.subr.mxu0 0.0
    %210 = vmatpush1.msra.mxu0 0.0
    %211 = vmatprep.subr.mxu0 0.0
    %212 = vmatpush1.msra.mxu0 0.0
    %213 = vmatprep.subr.mxu0 0.0
    %214 = vmatpush1.msra.mxu0 0.0
    %215 = vmatprep.subr.mxu0 0.0
    %216 = vmatpush1.msra.mxu0 0.0
    %217 = vmatprep.subr.mxu0 0.0
    %218 = vmatpush1.msra.mxu0 %v181
    %219 = vmatprep.subr.mxu0 0.0
    %220 = vmatpush1.msra.mxu0 %v180
    %221 = vmatprep.subr.mxu0 0.0
    %222 = vmatpush1.msra.mxu0 %v179
    %223 = vmatprep.subr.mxu0 0.0
    %224 = vmatpush1.msra.mxu0 %v178
    %225 = vmatprep.subr.mxu0 0.0
    %226 = vmatpush2.msra.mxu0 0.0
    %227 = vmatprep.subr.mxu0 0.0
    %228 = vmatpush2.msra.mxu0 0.0
    %229 = vmatprep.subr.mxu0 0.0
    %230 = vmatpush2.msra.mxu0 0.0
    %231 = vmatprep.subr.mxu0 0.0
    %232 = vmatpush2.msra.mxu0 0.0
    %233 = vmatprep.subr.mxu0 0.0
    %234 = vmatpush2.msra.mxu0 0.0
    %235 = vmatprep.subr.mxu0 0.0
    %236 = vmatpush2.msra.mxu0 0.0
    %237 = vmatprep.subr.mxu0 0.0
    %238 = vmatpush2.msra.mxu0 0.0
    %239 = vmatprep.subr.mxu0 0.0
    %240 = vmatpush2.msra.mxu0 0.0
    %241 = vmatprep.subr.mxu0 0.0
    %242 = vmatpush2.msra.mxu0 0.0
    %243 = vmatprep.subr.mxu0 0.0
    %244 = vmatpush2.msra.mxu0 0.0
    %245 = vmatprep.subr.mxu0 0.0
    %246 = vmatpush2.msra.mxu0 0.0
    %247 = vmatprep.subr.mxu0 0.0
    %248 = vmatpush2.msra.mxu0 0.0
    %249 = vmatprep.subr.mxu0 0.0
    %250 = vmatpush2.msra.mxu0 0.0
    %251 = vmatprep.subr.mxu0 0.0
    %252 = vmatpush2.msra.mxu0 0.0
    %253 = vmatprep.subr.mxu0 0.0
    %254 = vmatpush2.msra.mxu0 0.0
    %255 = vmatprep.subr.mxu0 0.0
    %256 = vmatpush2.msra.mxu0 0.0
    %257 = vmatprep.mubr.f32.mxu0 0.0
    %258 = vmatmul.mubr.f32.gmra.mxu0 %v191
    %v259 = vpop.f32.mrf.mxu0
    %v260 = vadd.f32 %v187, %v259
    %v261 = vpop.f32.mrf.mxu0
    %262 = vdwg.mxu0
    %263 = vst [vmem:[#allocation8] sm:$0x3] %v260
    // Predicated region
    $region34: #{tpu_custom_call.1} parent=1 // pred_check
      _
    $region35: #{tpu_custom_call.1} parent=1 // pred_check_branch
      %265 = sbr.rel (0) target = $region37
    $region36: #{tpu_custom_call.1} parent=1 // pred_region
      %s267 = ssub.s32 32, 32
      %268 = vsyncadd [#allocation4], %s267
      %s270 = sshll.u32 [#allocation8], 4
      %s271 = int_to_ptr.vmem [resolvable:$true] %s270
      %273 = dma.vmem_to_hbm [thread:$0]  %s271, 32, %s5, [#allocation4]
    $region37: #{tpu_custom_call.1} parent=1 // pred_fallthru
      _
    // Predicated region
    $region38: #{tpu_custom_call.1} parent=1 // pred_check
      _
    $region39: #{tpu_custom_call.1} parent=1 // pred_check_branch
      %275 = sbr.rel (0) target = $region41
    $region40: #{tpu_custom_call.1} parent=1 // pred_region
      %276 = dma.done [#allocation4], 32
    $region41: #{tpu_custom_call.1} parent=1 // pred_fallthru
      _
    %277 = vsyncpa [#allocation3], 1
    %278 = vsyncpa [#allocation6], 1
    %279 = vsyncpa [#allocation4], 1

</llo_original>
